<compile_context>
chip_gen: v7x
topology: tpu7x:2x2x1
jax: 0.10.0
libtpu: 0.0.40
codegen_flags: <defaults>
</compile_context>

<pallas_src>
import functools

import jax
import jax.numpy as jnp
from jax.experimental import pallas as pl
from jax.experimental.pallas import tpu as pltpu

_MIB = 1024 * 1024


def _vmem_limit_bytes(needed):
    # Raise the scoped-VMEM limit beyond the 16/32 MiB defaults so the blocks
    # we request stay fully double-buffered; cap well below v5e/v6e physical.
    return int(min(max(2 * needed, 32 * _MIB), 120 * _MIB))


def _pick_hw_tile(hw, per_unit_bytes, budget_bytes):
    """Largest multiple-of-128 divisor of hw whose streamed footprint fits."""
    best = None
    t = 128
    while t <= hw:
        if hw % t == 0 and t * per_unit_bytes <= budget_bytes:
            best = t
        t += 128
    return best


# ---------------------------------------------------------------------------
# Single-pass fused kernel.
# ---------------------------------------------------------------------------
def _se_fused_kernel(x_ref, w1_ref, b1_ref, w2_ref, b2_ref, o_ref):
    # x_ref: (1, C, HW) native dtype; w1: (Cr, C); b1: (Cr, 1); w2: (C, Cr);
    # b2: (C, 1); o_ref: (1, C, HW) native dtype.
    xf = x_ref[0].astype(jnp.float32)                     # (C, HW) f32 compute
    pooled = jnp.mean(xf, axis=1, keepdims=True)          # (C, 1)  f32 accum
    hidden = jnp.dot(w1_ref[...], pooled,
                     preferred_element_type=jnp.float32) + b1_ref[...]
    hidden = jnp.maximum(hidden, 0.0)                     # (Cr, 1)
    logits = jnp.dot(w2_ref[...], hidden,
                     preferred_element_type=jnp.float32) + b2_ref[...]
    scale = jax.nn.sigmoid(logits)                        # (C, 1)
    o_ref[0] = (scale * xf).astype(o_ref.dtype)           # lane-broadcast, no .T


# ---------------------------------------------------------------------------
# Two-pass HW-tiled fallback (large C*HW slabs, e.g. v7x's 64 MiB VMEM).
# ---------------------------------------------------------------------------
def _se_pool_excite_kernel(x_ref, w1_ref, b1_ref, w2_ref, b2_ref,
                           scale_ref, acc_ref, *, inv_hw):
    t = pl.program_id(1)

    @pl.when(t == 0)
    def _():
        acc_ref[...] = jnp.zeros_like(acc_ref)

    xf = x_ref[0].astype(jnp.float32)                     # (C, thw)
    acc_ref[...] += jnp.sum(xf, axis=1, keepdims=True)    # (C, 1) f32 accum

    @pl.when(t == pl.num_programs(1) - 1)
    def _():
        pooled = acc_ref[...] * inv_hw
        hidden = jnp.maximum(
            jnp.dot(w1_ref[...], pooled,
                    preferred_element_type=jnp.float32) + b1_ref[...], 0.0)
        logits = jnp.dot(w2_ref[...], hidden,
                         preferred_element_type=jnp.float32) + b2_ref[...]
        scale_ref[0] = jax.nn.sigmoid(logits)             # (C, 1)


def _se_apply_kernel(x_ref, scale_ref, o_ref):
    xf = x_ref[0].astype(jnp.float32)                     # (C, thw)
    o_ref[0] = (scale_ref[0] * xf).astype(o_ref.dtype)


# ---------------------------------------------------------------------------
# Wrapper.
# ---------------------------------------------------------------------------
def se_module(x, w1, b1, w2, b2, *, vmem_budget_bytes=48 * _MIB):
    """Squeeze-and-Excitation forward.

    x: (B, C, H, W) NCHW, any float dtype (streamed in native dtype).
    w1: (Cr, C, 1, 1), b1: (Cr,), w2: (C, Cr, 1, 1), b2: (C,)."""
    B, C, H, W = x.shape
    Cr = w1.shape[0]
    HW = H * W

    x_flat = x.reshape(B, C, HW)                    # keep native dtype
    w1m = w1[:, :, 0, 0].astype(jnp.float32)        # (Cr, C)
    b1c = b1.reshape(Cr, 1).astype(jnp.float32)     # (Cr, 1)
    w2m = w2[:, :, 0, 0].astype(jnp.float32)        # (C, Cr)
    b2c = b2.reshape(C, 1).astype(jnp.float32)      # (C, 1)

    itemsize = jnp.dtype(x.dtype).itemsize
    # x in + out, each double-buffered, per grid step.
    single_pass_bytes = 4 * C * HW * itemsize

    hw_tile = None
    if single_pass_bytes > vmem_budget_bytes:
        hw_tile = _pick_hw_tile(HW, 4 * C * itemsize, vmem_budget_bytes)

    if hw_tile is None:
        # ---- single-pass fused path --------------------------------------
        out_flat = pl.pallas_call(
            _se_fused_kernel,
            out_shape=jax.ShapeDtypeStruct((B, C, HW), x.dtype),
            grid_spec=pltpu.PrefetchScalarGridSpec(
                num_scalar_prefetch=0,
                grid=(B,),
                in_specs=[
                    pl.BlockSpec((1, C, HW), lambda b: (b, 0, 0)),
                    pl.BlockSpec((Cr, C), lambda b: (0, 0)),
                    pl.BlockSpec((Cr, 1), lambda b: (0, 0)),
                    pl.BlockSpec((C, Cr), lambda b: (0, 0)),
                    pl.BlockSpec((C, 1), lambda b: (0, 0)),
                ],
                out_specs=pl.BlockSpec((1, C, HW), lambda b: (b, 0, 0)),
            ),
            input_output_aliases={0: 0},
            compiler_params=pltpu.CompilerParams(
                dimension_semantics=("parallel",),
                vmem_limit_bytes=_vmem_limit_bytes(single_pass_bytes),
            ),
        )(x_flat, w1m, b1c, w2m, b2c)
        return out_flat.reshape(B, C, H, W)

    # ---- two-pass HW-tiled path -------------------------------------------
    n_tiles = HW // hw_tile
    tile_bytes = 4 * C * hw_tile * itemsize

    # Pass 1: per-channel mean + excitation -> sigmoid scale (B, C, 1) f32.
    scale = pl.pallas_call(
        functools.partial(_se_pool_excite_kernel, inv_hw=1.0 / HW),
        out_shape=jax.ShapeDtypeStruct((B, C, 1), jnp.float32),
        grid_spec=pltpu.PrefetchScalarGridSpec(
            num_scalar_prefetch=0,
            grid=(B, n_tiles),
            in_specs=[
                pl.BlockSpec((1, C, hw_tile), lambda b, t: (b, 0, t)),
                pl.BlockSpec((Cr, C), lambda b, t: (0, 0)),
                pl.BlockSpec((Cr, 1), lambda b, t: (0, 0)),
                pl.BlockSpec((C, Cr), lambda b, t: (0, 0)),
                pl.BlockSpec((C, 1), lambda b, t: (0, 0)),
            ],
            out_specs=pl.BlockSpec((1, C, 1), lambda b, t: (b, 0, 0)),
            scratch_shapes=[pltpu.VMEM((C, 1), jnp.float32)],
        ),
        compiler_params=pltpu.CompilerParams(
            dimension_semantics=("parallel", "arbitrary"),
            vmem_limit_bytes=_vmem_limit_bytes(tile_bytes),
        ),
    )(x_flat, w1m, b1c, w2m, b2c)

    # Pass 2: re-stream x tiles and apply the scale (both axes parallel).
    out_flat = pl.pallas_call(
        _se_apply_kernel,
        out_shape=jax.ShapeDtypeStruct((B, C, HW), x.dtype),
        grid_spec=pltpu.PrefetchScalarGridSpec(
            num_scalar_prefetch=0,
            grid=(B, n_tiles),
            in_specs=[
                pl.BlockSpec((1, C, hw_tile), lambda b, t: (b, 0, t)),
                pl.BlockSpec((1, C, 1), lambda b, t: (b, 0, 0)),
            ],
            out_specs=pl.BlockSpec((1, C, hw_tile), lambda b, t: (b, 0, t)),
        ),
        input_output_aliases={0: 0},
        compiler_params=pltpu.CompilerParams(
            dimension_semantics=("parallel", "parallel"),
            vmem_limit_bytes=_vmem_limit_bytes(tile_bytes),
        ),
    )(x_flat, scale)

    return out_flat.reshape(B, C, H, W)


def _reference(x, w1, b1, w2, b2):
    # Pure-JAX reference mirroring the PyTorch forward.
    pooled = x.mean(axis=(2, 3), keepdims=True)                       # (B,C,1,1)
    h = jnp.einsum('bcij,oc->boij', pooled, w1[:, :, 0, 0]) + b1[None, :, None, None]
    h = jnp.maximum(h, 0.0)
    s = jnp.einsum('bcij,oc->boij', h, w2[:, :, 0, 0]) + b2[None, :, None, None]
    s = jax.nn.sigmoid(s)
    return s * x


if __name__ == "__main__":
    key = jax.random.PRNGKey(0)
    B, C, H, W = 2, 8, 16, 16
    reduction = 4
    Cr = C // reduction

    kx, k1, k2, k3, k4 = jax.random.split(key, 5)
    x = jax.random.normal(kx, (B, C, H, W), dtype=jnp.float32)
    # Deterministic synthetic parameters (shapes from nn.Conv2d(..., 1x1)).
    w1 = jax.random.normal(k1, (Cr, C, 1, 1), dtype=jnp.float32) * 0.5
    b1 = jax.random.normal(k2, (Cr,), dtype=jnp.float32) * 0.1
    w2 = jax.random.normal(k3, (C, Cr, 1, 1), dtype=jnp.float32) * 0.5
    b2 = jax.random.normal(k4, (C,), dtype=jnp.float32) * 0.1

    ref = _reference(x, w1, b1, w2, b2)

    # 1) Single-pass fused path (default VMEM budget).
    out = jax.block_until_ready(se_module(x, w1, b1, w2, b2))
    assert out.shape == (B, C, H, W) and out.dtype == x.dtype
    assert jnp.allclose(out, ref, atol=1e-5, rtol=1e-5), "single-pass mismatch"

    # 2) Two-pass HW-tiled path (force it by shrinking the VMEM budget).
    out_tiled = jax.block_until_ready(
        se_module(x, w1, b1, w2, b2, vmem_budget_bytes=20_000))
    assert jnp.allclose(out_tiled, ref, atol=1e-5, rtol=1e-5), "two-pass mismatch"

    # 3) bf16 streaming path (native-dtype I/O, f32 internal accumulation).
    x_bf = x.astype(jnp.bfloat16)
    out_bf = jax.block_until_ready(se_module(x_bf, w1, b1, w2, b2))
    assert out_bf.dtype == jnp.bfloat16
    ref_bf = _reference(x_bf.astype(jnp.float32), w1, b1, w2, b2)
    assert jnp.allclose(out_bf.astype(jnp.float32), ref_bf,
                        atol=3e-2, rtol=3e-2), "bf16 mismatch"

    print("KERNEL_OK")
</pallas_src>

<mosaic_0001>
module attributes {stable_mosaic.version = 11 : i64} {
  func.func @_se_fused_kernel(%arg0: i32, %arg1: memref<1x8x256xf32, #tpu.memory_space<vmem>>, %arg2: memref<2x8xf32, #tpu.memory_space<vmem>>, %arg3: memref<2x1xf32, #tpu.memory_space<vmem>>, %arg4: memref<8x2xf32, #tpu.memory_space<vmem>>, %arg5: memref<8x1xf32, #tpu.memory_space<vmem>>, %arg6: memref<1x8x256xf32, #tpu.memory_space<vmem>>) attributes {dimension_semantics = [#tpu.dimension_semantics<parallel>], iteration_bounds = array<i64: 2>, scalar_prefetch = 0 : i64, scratch_operands = 0 : i64, tpu.core_type = #tpu.core_type<tc>, window_params = [{transform_indices = @transform_0, window_bounds = array<i64: 1, 8, 256>}, {pipeline_mode = #tpu.pipeline_mode<synchronous>, transform_indices = @transform_1, window_bounds = array<i64: 2, 8>}, {pipeline_mode = #tpu.pipeline_mode<synchronous>, transform_indices = @transform_2, window_bounds = array<i64: 2, 1>}, {pipeline_mode = #tpu.pipeline_mode<synchronous>, transform_indices = @transform_3, window_bounds = array<i64: 8, 2>}, {pipeline_mode = #tpu.pipeline_mode<synchronous>, transform_indices = @transform_4, window_bounds = array<i64: 8, 1>}, {transform_indices = @transform_5, window_bounds = array<i64: 1, 8, 256>}]} {
    %c0 = arith.constant 0 : index
    %c0_0 = arith.constant 0 : index
    %c0_1 = arith.constant 0 : index
    %0 = vector.load %arg1[%c0, %c0_0, %c0_1] : memref<1x8x256xf32, #tpu.memory_space<vmem>>, vector<1x8x256xf32>
    %1 = vector.shape_cast %0 : vector<1x8x256xf32> to vector<8x256xf32>
    %cst = arith.constant dense<0.000000e+00> : vector<8xf32>
    %2 = vector.multi_reduction <add>, %1, %cst [1] : vector<8x256xf32> to vector<8xf32>
    %3 = vector.shape_cast %2 : vector<8xf32> to vector<8x1xf32>
    %cst_2 = arith.constant 2.560000e+02 : f32
    %4 = vector.broadcast %cst_2 : f32 to vector<8x1xf32>
    %5 = arith.divf %3, %4 : vector<8x1xf32>
    %c0_3 = arith.constant 0 : index
    %c0_4 = arith.constant 0 : index
    %6 = vector.load %arg2[%c0_3, %c0_4] : memref<2x8xf32, #tpu.memory_space<vmem>>, vector<2x8xf32>
    %cst_5 = arith.constant dense<0.000000e+00> : vector<2x1xf32>
    %7 = tpu.matmul %6, %5, %cst_5 {dimension_numbers = #tpu.dot_dimension_numbers<[1], [0], [0], [1], [0, 0, 1, 1], [], []>} : vector<2x8xf32>, vector<8x1xf32>, vector<2x1xf32> -> vector<2x1xf32>
    %c0_6 = arith.constant 0 : index
    %c0_7 = arith.constant 0 : index
    %8 = vector.load %arg3[%c0_6, %c0_7] : memref<2x1xf32, #tpu.memory_space<vmem>>, vector<2x1xf32>
    %9 = arith.addf %7, %8 : vector<2x1xf32>
    %cst_8 = arith.constant 0.000000e+00 : f32
    %10 = vector.broadcast %cst_8 : f32 to vector<2x1xf32>
    %11 = arith.maximumf %9, %10 : vector<2x1xf32>
    %c0_9 = arith.constant 0 : index
    %c0_10 = arith.constant 0 : index
    %12 = vector.load %arg4[%c0_9, %c0_10] : memref<8x2xf32, #tpu.memory_space<vmem>>, vector<8x2xf32>
    %cst_11 = arith.constant dense<0.000000e+00> : vector<8x1xf32>
    %13 = tpu.matmul %12, %11, %cst_11 {dimension_numbers = #tpu.dot_dimension_numbers<[1], [0], [0], [1], [0, 0, 1, 1], [], []>} : vector<8x2xf32>, vector<2x1xf32>, vector<8x1xf32> -> vector<8x1xf32>
    %c0_12 = arith.constant 0 : index
    %c0_13 = arith.constant 0 : index
    %14 = vector.load %arg5[%c0_12, %c0_13] : memref<8x1xf32, #tpu.memory_space<vmem>>, vector<8x1xf32>
    %15 = arith.addf %13, %14 : vector<8x1xf32>
    %16 = arith.negf %15 : vector<8x1xf32>
    %17 = math.exp %16 : vector<8x1xf32>
    %cst_14 = arith.constant 1.000000e+00 : f32
    %18 = vector.broadcast %cst_14 : f32 to vector<8x1xf32>
    %19 = arith.addf %18, %17 : vector<8x1xf32>
    %20 = arith.divf %18, %19 : vector<8x1xf32>
    %21 = vector.broadcast %20 : vector<8x1xf32> to vector<8x256xf32>
    %22 = arith.mulf %21, %1 : vector<8x256xf32>
    %c0_15 = arith.constant 0 : index
    %c0_16 = arith.constant 0 : index
    %c0_17 = arith.constant 0 : index
    %23 = vector.load %arg6[%c0_15, %c0_16, %c0_17] : memref<1x8x256xf32, #tpu.memory_space<vmem>>, vector<1x8x256xf32>
    %24 = vector.shape_cast %23 : vector<1x8x256xf32> to vector<8x256xf32>
    %25 = vector.shape_cast %22 : vector<8x256xf32> to vector<1x8x256xf32>
    tpu.vector_store %arg6[%c0_15, %c0_16, %c0_17], %25 {strides = array<i32>} : memref<1x8x256xf32, #tpu.memory_space<vmem>>, vector<1x8x256xf32>,
    return
  }
  func.func @transform_0(%arg0: i32) -> (i32, i32, i32) {
    %c0_i32 = arith.constant 0 : i32
    %c0_i32_0 = arith.constant 0 : i32
    %c0_i32_1 = arith.constant 0 : i32
    return %arg0, %c0_i32, %c0_i32_0 : i32, i32, i32
  }
  func.func @transform_1(%arg0: i32) -> (i32, i32) {
    %c0_i32 = arith.constant 0 : i32
    %c0_i32_0 = arith.constant 0 : i32
    %c0_i32_1 = arith.constant 0 : i32
    return %c0_i32, %c0_i32_0 : i32, i32
  }
  func.func @transform_2(%arg0: i32) -> (i32, i32) {
    %c0_i32 = arith.constant 0 : i32
    %c0_i32_0 = arith.constant 0 : i32
    %c0_i32_1 = arith.constant 0 : i32
    return %c0_i32, %c0_i32_0 : i32, i32
  }
  func.func @transform_3(%arg0: i32) -> (i32, i32) {
    %c0_i32 = arith.constant 0 : i32
    %c0_i32_0 = arith.constant 0 : i32
    %c0_i32_1 = arith.constant 0 : i32
    return %c0_i32, %c0_i32_0 : i32, i32
  }
  func.func @transform_4(%arg0: i32) -> (i32, i32) {
    %c0_i32 = arith.constant 0 : i32
    %c0_i32_0 = arith.constant 0 : i32
    %c0_i32_1 = arith.constant 0 : i32
    return %c0_i32, %c0_i32_0 : i32, i32
  }
  func.func @transform_5(%arg0: i32) -> (i32, i32, i32) {
    %c0_i32 = arith.constant 0 : i32
    %c0_i32_0 = arith.constant 0 : i32
    %c0_i32_1 = arith.constant 0 : i32
    return %arg0, %c0_i32, %c0_i32_0 : i32, i32, i32
  }
}

</mosaic_0001>

<llo_original>
// kernel: tpu_custom_call.1
$region0: #{tpu_custom_call.1}
  #allocation0 [shape = 'u32[]', space=smem, size = 0x4, offset = 0x4, fixed_abs, tag = 'smem constant byte address 0x4 - core index']
  #allocation1 [shape = 'u32[144,128]{1,0:T(1,128)}', space=vmem, size = 0x12000, scoped, tag = 'internal scratch']
  %s0 = inlined_call_operand.hbm [shape: f32[2,8,256], index: 0, kind: input, shape index: {}, may-alias: {0,5}]
  %s1 = inlined_call_operand.vmem [shape: f32[2,8], index: 1, kind: input, shape index: {}]
  %s2 = inlined_call_operand.vmem [shape: f32[2,1], index: 2, kind: input, shape index: {}]
  %s3 = inlined_call_operand.vmem [shape: f32[8,2], index: 3, kind: input, shape index: {}]
  %s4 = inlined_call_operand.vmem [shape: f32[8,1], index: 4, kind: input, shape index: {}]
  %s5 = inlined_call_operand.hbm [shape: f32[2,8,256], index: 5, kind: output, shape index: {}, may-alias: {0,5}]
  %s6 = sld [smem:[#allocation0]]
  $region57: #{tpu_custom_call.1} parent=0
    _
  %s8 = ssub.s32 1, %s6
  %s9 = scalar_select 0, %s8, %s6
  $region1: #{tpu_custom_call.1} parent=0
    #allocation2 [shape = 'u8[16384]{0}', space=vmem, size = 0x4000, scoped, tag = 'input window, operand 0']
    #allocation3 [shape = 's32[2]{0}', space=sflag, size = 0x8, scoped, tag = 'scoped memory for tpu_custom_call.1']
    #allocation4 [shape = 's32[2]{0}', space=sflag, size = 0x8, scoped, tag = 'scoped memory for tpu_custom_call.1']
    #allocation5 [shape = 'u8[16384]{0}', space=vmem, size = 0x4000, scoped, tag = 'output window, operand 0']
    %10 = vsyncpa [#allocation3], 0
    %s11 = scalar_lea.sflag [#allocation3], 1
    %12 = vsyncpa %s11, 0
    %13 = vsyncpa [#allocation4], 0
    %s14 = scalar_lea.sflag [#allocation4], 1
    %15 = vsyncpa %s14, 0
    loop: start=0, step=1, limit=4
    $region2: #{tpu_custom_call.1} parent=1 // loop_pre_header
      _
    $region3: #{tpu_custom_call.1} parent=1 // loop_header
      %s17 = sphi 0, %s21
      %p18 = scmp.ge.s32.totalorder %s17, 4
      %s27 = sphi 0, %s29
      %s30 = sphi 0, %s27
      %s31 = sphi 0, %s30
      %s47 = sphi 0, %s31
      %s51 = sphi 0, %s51
      %s53 = sphi 0, %s51
      %s54 = sphi 0, %s53
      %s68 = sphi 0, %s54
      %s72 = sphi 0, %s72
      %s74 = sphi 0, %s72
      %s75 = sphi 0, %s74
      %s89 = sphi 0, %s75
      %s93 = sphi 0, %s93
      %s95 = sphi 0, %s93
      %s96 = sphi 0, %s95
      %s110 = sphi 0, %s96
      %s114 = sphi 0, %s114
      %s116 = sphi 0, %s114
      %s117 = sphi 0, %s116
      %s131 = sphi 0, %s117
      %s137 = sphi 0, %s139
      %s140 = sphi 0, %s137
      %s141 = sphi 0, %s140
      %s157 = sphi 0, %s141
    $region4: #{tpu_custom_call.1} parent=1 // loop_header_branch
      %20 = sbr.rel (%p18) target = $region8
    $region5: #{tpu_custom_call.1} parent=1 // loop_body
      %s22 = ssub.s32 %s17, 1
      %s23 = ssub.s32 %s17, 2
      %s24 = sadd.s32 %s17, 1
      %s25 = ssub.s32 %s17, %s24
      %p26 = scmp.eq.s32.totalorder %s25, 0
      %s28 = sadd.s32 %s27, 1
      %s29 = scalar_select %p26, %s27, %s28
      %p32 = pneg %p26
      %p33 = scmp.eq.s32.totalorder %s17, 1
      %p34 = por %p32, %p33
      %p35 = scmp.ne.s32.totalorder %s27, %s30
      %p36 = scmp.eq.s32.totalorder %s17, 0
      %p37 = por %p35, %p36
      %p38 = scmp.ne.s32.totalorder %s27, %s30
      %p39 = scmp.eq.s32.totalorder %s22, 1
      %p40 = por %p38, %p39
      %p41 = scmp.ne.s32.totalorder %s30, %s31
      %p42 = scmp.eq.s32.totalorder %s22, 0
      %p43 = por %p41, %p42
      %p44 = scmp.ne.s32.totalorder %s30, %s31
      %p45 = scmp.eq.s32.totalorder %s23, 1
      %p46 = por %p44, %p45
      %p48 = scmp.ne.s32.totalorder %s31, %s47
      %p49 = scmp.eq.s32.totalorder %s23, 0
      %p50 = por %p48, %p49
      %s52 = sadd.s32 %s51, 1
      %p55 = scmp.eq.s32.totalorder %s17, 1
      %p56 = scmp.ne.s32.totalorder %s51, %s53
      %p57 = scmp.eq.s32.totalorder %s17, 0
      %p58 = por %p56, %p57
      %p59 = scmp.ne.s32.totalorder %s51, %s53
      %p60 = scmp.eq.s32.totalorder %s22, 1
      %p61 = por %p59, %p60
      %p62 = scmp.ne.s32.totalorder %s53, %s54
      %p63 = scmp.eq.s32.totalorder %s22, 0
      %p64 = por %p62, %p63
      %p65 = scmp.ne.s32.totalorder %s53, %s54
      %p66 = scmp.eq.s32.totalorder %s23, 1
      %p67 = por %p65, %p66
      %p69 = scmp.ne.s32.totalorder %s54, %s68
      %p70 = scmp.eq.s32.totalorder %s23, 0
      %p71 = por %p69, %p70
      %s73 = sadd.s32 %s72, 1
      %p76 = scmp.eq.s32.totalorder %s17, 1
      %p77 = scmp.ne.s32.totalorder %s72, %s74
      %p78 = scmp.eq.s32.totalorder %s17, 0
      %p79 = por %p77, %p78
      %p80 = scmp.ne.s32.totalorder %s72, %s74
      %p81 = scmp.eq.s32.totalorder %s22, 1
      %p82 = por %p80, %p81
      %p83 = scmp.ne.s32.totalorder %s74, %s75
      %p84 = scmp.eq.s32.totalorder %s22, 0
      %p85 = por %p83, %p84
      %p86 = scmp.ne.s32.totalorder %s74, %s75
      %p87 = scmp.eq.s32.totalorder %s23, 1
      %p88 = por %p86, %p87
      %p90 = scmp.ne.s32.totalorder %s75, %s89
      %p91 = scmp.eq.s32.totalorder %s23, 0
      %p92 = por %p90, %p91
      %s94 = sadd.s32 %s93, 1
      %p97 = scmp.eq.s32.totalorder %s17, 1
      %p98 = scmp.ne.s32.totalorder %s93, %s95
      %p99 = scmp.eq.s32.totalorder %s17, 0
      %p100 = por %p98, %p99
      %p101 = scmp.ne.s32.totalorder %s93, %s95
      %p102 = scmp.eq.s32.totalorder %s22, 1
      %p103 = por %p101, %p102
      %p104 = scmp.ne.s32.totalorder %s95, %s96
      %p105 = scmp.eq.s32.totalorder %s22, 0
      %p106 = por %p104, %p105
      %p107 = scmp.ne.s32.totalorder %s95, %s96
      %p108 = scmp.eq.s32.totalorder %s23, 1
      %p109 = por %p107, %p108
      %p111 = scmp.ne.s32.totalorder %s96, %s110
      %p112 = scmp.eq.s32.totalorder %s23, 0
      %p113 = por %p111, %p112
      %s115 = sadd.s32 %s114, 1
      %p118 = scmp.eq.s32.totalorder %s17, 1
      %p119 = scmp.ne.s32.totalorder %s114, %s116
      %p120 = scmp.eq.s32.totalorder %s17, 0
      %p121 = por %p119, %p120
      %p122 = scmp.ne.s32.totalorder %s114, %s116
      %p123 = scmp.eq.s32.totalorder %s22, 1
      %p124 = por %p122, %p123
      %p125 = scmp.ne.s32.totalorder %s116, %s117
      %p126 = scmp.eq.s32.totalorder %s22, 0
      %p127 = por %p125, %p126
      %p128 = scmp.ne.s32.totalorder %s116, %s117
      %p129 = scmp.eq.s32.totalorder %s23, 1
      %p130 = por %p128, %p129
      %p132 = scmp.ne.s32.totalorder %s117, %s131
      %p133 = scmp.eq.s32.totalorder %s23, 0
      %p134 = por %p132, %p133
      %s135 = ssub.s32 %s17, %s24
      %p136 = scmp.eq.s32.totalorder %s135, 0
      %s138 = sadd.s32 %s137, 1
      %s139 = scalar_select %p136, %s137, %s138
      %p142 = pneg %p136
      %p143 = scmp.eq.s32.totalorder %s17, 1
      %p144 = por %p142, %p143
      %p145 = scmp.ne.s32.totalorder %s137, %s140
      %p146 = scmp.eq.s32.totalorder %s17, 0
      %p147 = por %p145, %p146
      %p148 = scmp.ne.s32.totalorder %s137, %s140
      %p149 = scmp.eq.s32.totalorder %s22, 1
      %p150 = por %p148, %p149
      %p151 = scmp.ne.s32.totalorder %s140, %s141
      %p152 = scmp.eq.s32.totalorder %s22, 0
      %p153 = por %p151, %p152
      %p154 = scmp.ne.s32.totalorder %s140, %s141
      %p155 = scmp.eq.s32.totalorder %s23, 1
      %p156 = por %p154, %p155
      %p158 = scmp.ne.s32.totalorder %s141, %s157
      %p159 = scmp.eq.s32.totalorder %s23, 0
      %p160 = por %p158, %p159
      %p161 = scmp.le.s32.totalorder 1, %s17
      %p162 = scmp.lt.s32.totalorder %s17, 3
      %p163 = pnand %p161, %p162
      %p164 = pneg %p163
      // Predicated region
      $region9: #{tpu_custom_call.1} parent=5 // pred_check
        _
      $region10: #{tpu_custom_call.1} parent=5 // pred_check_branch
        %166 = sbr.rel (%p163) target = $region12
      $region11: #{tpu_custom_call.1} parent=5 // pred_region
        %s167 = ssub.s32 %s17, 1
        // Predicated region
        $region13: #{tpu_custom_call.1} parent=11 // pred_check
          %p168 = pneg %p64
        $region14: #{tpu_custom_call.1} parent=11 // pred_check_branch
          %170 = sbr.rel (%p168) target = $region16
        $region15: #{tpu_custom_call.1} parent=11 // pred_region
          _
        $region16: #{tpu_custom_call.1} parent=11 // pred_fallthru
          _
        // Predicated region
        $region17: #{tpu_custom_call.1} parent=11 // pred_check
          %p171 = pneg %p85
        $region18: #{tpu_custom_call.1} parent=11 // pred_check_branch
          %173 = sbr.rel (%p171) target = $region20
        $region19: #{tpu_custom_call.1} parent=11 // pred_region
          _
        $region20: #{tpu_custom_call.1} parent=11 // pred_fallthru
          _
        // Predicated region
        $region21: #{tpu_custom_call.1} parent=11 // pred_check
          %p174 = pneg %p106
        $region22: #{tpu_custom_call.1} parent=11 // pred_check_branch
          %176 = sbr.rel (%p174) target = $region24
        $region23: #{tpu_custom_call.1} parent=11 // pred_region
          _
        $region24: #{tpu_custom_call.1} parent=11 // pred_fallthru
          _
        // Predicated region
        $region25: #{tpu_custom_call.1} parent=11 // pred_check
          %p177 = pneg %p127
        $region26: #{tpu_custom_call.1} parent=11 // pred_check_branch
          %179 = sbr.rel (%p177) target = $region28
        $region27: #{tpu_custom_call.1} parent=11 // pred_region
          _
        $region28: #{tpu_custom_call.1} parent=11 // pred_fallthru
          _
      $region12: #{tpu_custom_call.1} parent=5 // pred_fallthru
        _
      %p180 = scmp.lt.s32.totalorder %s17, 2
      // Predicated region
      $region29: #{tpu_custom_call.1} parent=5 // pred_check
        %p181 = pneg %p180
      $region30: #{tpu_custom_call.1} parent=5 // pred_check_branch
        %183 = sbr.rel (%p181) target = $region32
      $region31: #{tpu_custom_call.1} parent=5 // pred_region
        // Predicated region
        $region33: #{tpu_custom_call.1} parent=31 // pred_check
          %p184 = pneg %p37
        $region34: #{tpu_custom_call.1} parent=31 // pred_check_branch
          %186 = sbr.rel (%p184) target = $region36
        $region35: #{tpu_custom_call.1} parent=31 // pred_region
          %s187 = sand.u32 %s27, 1
          %s188 = scalar_lea.sflag [#allocation3], %s187
          %s189 = sand.u32 %s27, 1
          %s190 = smul.addr %s189, 16
          %s191 = scalar_lea.vmem [#allocation2], %s190
          %s193 = ssub.s32 256, 256
          %194 = vsyncadd %s188, %s193
          %s195 = smul.addr %s17, 2
          %s196 = smul.addr %s195, 128
          %s197 = scalar_lea.hbm %s0, %s196
          %s199 = sshll.u32 %s191, 4
          %s200 = int_to_ptr.vmem [resolvable:$true] %s199
          %202 = dma.hbm_to_vmem [thread:$0]  %s197, 256, %s200, %s188
        $region36: #{tpu_custom_call.1} parent=31 // pred_fallthru
          _
      $region32: #{tpu_custom_call.1} parent=5 // pred_fallthru
        _
      %p203 = scmp.le.s32.totalorder 1, %s17
      %p204 = scmp.lt.s32.totalorder %s17, 3
      %p205 = pnand %p203, %p204
      %p206 = pneg %p205
      // Predicated region
      $region37: #{tpu_custom_call.1} parent=5 // pred_check
        _
      $region38: #{tpu_custom_call.1} parent=5 // pred_check_branch
        %208 = sbr.rel (%p205) target = $region40
      $region39: #{tpu_custom_call.1} parent=5 // pred_region
        %s209 = ssub.s32 %s17, 1
        %s210 = sand.u32 %s30, 1
        %s211 = scalar_lea.sflag [#allocation3], %s210
        %s212 = sand.u32 %s30, 1
        %s213 = smul.addr %s212, 16
        %s214 = scalar_lea.vmem [#allocation2], %s213
        // Predicated region
        $region41: #{tpu_custom_call.1} parent=39 // pred_check
          %p215 = pneg %p43
        $region42: #{tpu_custom_call.1} parent=39 // pred_check_branch
          %217 = sbr.rel (%p215) target = $region44
        $region43: #{tpu_custom_call.1} parent=39 // pred_region
          %218 = dma.done %s211, 256
        $region44: #{tpu_custom_call.1} parent=39 // pred_fallthru
          _
        %s219 = sand.u32 %s30, 1
        %s220 = scalar_lea.sflag [#allocation3], %s219
        %s221 = sand.u32 %s30, 1
        %s222 = smul.addr %s221, 16
        %s223 = scalar_lea.vmem [#allocation2], %s222
        %p224 = pneg %p43
        %p225 = pneg %p40
        %p226 = pneg %p64
        %p227 = pneg %p61
        %p228 = pneg %p85
        %p229 = pneg %p82
        %p230 = pneg %p106
        %p231 = pneg %p103
        %p232 = pneg %p127
        %p233 = pneg %p124
        %p234 = pneg %p153
        %p235 = pneg %p150
        %s236 = sand.u32 %s140, 1
        %s237 = scalar_lea.sflag [#allocation4], %s236
        %s238 = sand.u32 %s140, 1
        %s239 = smul.addr %s238, 16
        %s240 = scalar_lea.vmem [#allocation5], %s239
        %v241 = vld [vmem:[%s214] sm:$0xff]
        %v242 = vld [vmem:[%s214 + $0x8] sm:$0xff]
        %v243 = vadd.f32 %v241, %v242
        %244 = vadd.xlane.f32.xlu0 %v243
        %v245 = vpop.xlane.xlu0 %244
        %v246 = vrcp.pop 256.0
        %v247 = vmul.f32 %v245, %v246
        %v248 = vld [vmem:[%s1] sm:$0x3]
        %v249 = vld [vmem:[%s2] sm:$0x3]
        %vm250 = vcmask 64512
        %v252 = vsel %vm250, %v248, 0
        %254 = vmatprep.subr.mxu0 0.0
        %255 = vmatpush1.msra.mxu0 %v247
        %256 = vmatprep.subr.mxu0 0.0
        %257 = vmatpush1.msra.mxu0 0.0
        %258 = vmatprep.subr.mxu0 0.0
        %259 = vmatpush1.msra.mxu0 0.0
        %260 = vmatprep.subr.mxu0 0.0
        %261 = vmatpush1.msra.mxu0 0.0
        %262 = vmatprep.subr.mxu0 0.0
        %263 = vmatpush1.msra.mxu0 0.0
        %264 = vmatprep.subr.mxu0 0.0
        %265 = vmatpush1.msra.mxu0 0.0
        %266 = vmatprep.subr.mxu0 0.0
        %267 = vmatpush1.msra.mxu0 0.0
        %268 = vmatprep.subr.mxu0 0.0
        %269 = vmatpush1.msra.mxu0 0.0
        %270 = vmatprep.subr.mxu0 0.0
        %271 = vmatpush1.msra.mxu0 0.0
        %272 = vmatprep.subr.mxu0 0.0
        %273 = vmatpush1.msra.mxu0 0.0
        %274 = vmatprep.subr.mxu0 0.0
        %275 = vmatpush1.msra.mxu0 0.0
        %276 = vmatprep.subr.mxu0 0.0
        %277 = vmatpush1.msra.mxu0 0.0
        %278 = vmatprep.subr.mxu0 0.0
        %279 = vmatpush1.msra.mxu0 0.0
        %280 = vmatprep.subr.mxu0 0.0
        %281 = vmatpush1.msra.mxu0 0.0
        %282 = vmatprep.subr.mxu0 0.0
        %283 = vmatpush1.msra.mxu0 0.0
        %284 = vmatprep.subr.mxu0 0.0
        %285 = vmatpush1.msra.mxu0 0.0
        %286 = vmatprep.subr.mxu0 0.0
        %287 = vmatpush1.msra.mxu0 0.0
        %288 = vmatprep.subr.mxu0 0.0
        %289 = vmatpush1.msra.mxu0 0.0
        %290 = vmatprep.subr.mxu0 0.0
        %291 = vmatpush1.msra.mxu0 0.0
        %292 = vmatprep.subr.mxu0 0.0
        %293 = vmatpush1.msra.mxu0 0.0
        %294 = vmatprep.subr.mxu0 0.0
        %295 = vmatpush1.msra.mxu0 0.0
        %296 = vmatprep.subr.mxu0 0.0
        %297 = vmatpush1.msra.mxu0 0.0
        %298 = vmatprep.subr.mxu0 0.0
        %299 = vmatpush1.msra.mxu0 0.0
        %300 = vmatprep.subr.mxu0 0.0
        %301 = vmatpush1.msra.mxu0 0.0
        %302 = vmatprep.subr.mxu0 0.0
        %303 = vmatpush1.msra.mxu0 0.0
        %304 = vmatprep.subr.mxu0 0.0
        %305 = vmatpush1.msra.mxu0 0.0
        %306 = vmatprep.subr.mxu0 0.0
        %307 = vmatpush1.msra.mxu0 0.0
        %308 = vmatprep.subr.mxu0 0.0
        %309 = vmatpush1.msra.mxu0 0.0
        %310 = vmatprep.subr.mxu0 0.0
        %311 = vmatpush1.msra.mxu0 0.0
        %312 = vmatprep.subr.mxu0 0.0
        %313 = vmatpush1.msra.mxu0 0.0
        %314 = vmatprep.subr.mxu0 0.0
        %315 = vmatpush1.msra.mxu0 0.0
        %316 = vmatprep.subr.mxu0 0.0
        %317 = vmatpush1.msra.mxu0 0.0
        %318 = vmatprep.mubr.f32.mxu0 0.0
        %319 = vmatmul.mubr.f32.gmra.mrb[0].mxu0 %v252
        %v320 = vpop.f32.mrb[0].mxu0
        %v321 = vadd.f32 %v249, %v320
        %v322 = vpop.f32.mrb[0].mxu0
        %323 = vdwg.mxu0
        %v324 = vmax.f32 %v321, 0.0
        %v325 = vld [vmem:[%s3] sm:$0xff]
        %v326 = vld [vmem:[%s4] sm:$0xff]
        %vm327 = vcmask 15360
        %v329 = vsel %vm327, %v325, 0
        %vm331 = vcmask 1041408
        %v333 = vsel %vm331, %v324, 0
        %335 = vmatprep.subr.mxu0 0.0
        %336 = vmatpush1.msra.mxu0 %v333
        %337 = vmatprep.subr.mxu0 0.0
        %338 = vmatpush1.msra.mxu0 0.0
        %339 = vmatprep.subr.mxu0 0.0
        %340 = vmatpush1.msra.mxu0 0.0
        %341 = vmatprep.subr.mxu0 0.0
        %342 = vmatpush1.msra.mxu0 0.0
        %343 = vmatprep.subr.mxu0 0.0
        %344 = vmatpush1.msra.mxu0 0.0
        %345 = vmatprep.subr.mxu0 0.0
        %346 = vmatpush1.msra.mxu0 0.0
        %347 = vmatprep.subr.mxu0 0.0
        %348 = vmatpush1.msra.mxu0 0.0
        %349 = vmatprep.subr.mxu0 0.0
        %350 = vmatpush1.msra.mxu0 0.0
        %351 = vmatprep.subr.mxu0 0.0
        %352 = vmatpush1.msra.mxu0 0.0
        %353 = vmatprep.subr.mxu0 0.0
        %354 = vmatpush1.msra.mxu0 0.0
        %355 = vmatprep.subr.mxu0 0.0
        %356 = vmatpush1.msra.mxu0 0.0
        %357 = vmatprep.subr.mxu0 0.0
        %358 = vmatpush1.msra.mxu0 0.0
        %359 = vmatprep.subr.mxu0 0.0
        %360 = vmatpush1.msra.mxu0 0.0
        %361 = vmatprep.subr.mxu0 0.0
        %362 = vmatpush1.msra.mxu0 0.0
        %363 = vmatprep.subr.mxu0 0.0
        %364 = vmatpush1.msra.mxu0 0.0
        %365 = vmatprep.subr.mxu0 0.0
        %366 = vmatpush1.msra.mxu0 0.0
        %367 = vmatprep.subr.mxu0 0.0
        %368 = vmatpush1.msra.mxu0 0.0
        %369 = vmatprep.subr.mxu0 0.0
        %370 = vmatpush1.msra.mxu0 0.0
        %371 = vmatprep.subr.mxu0 0.0
        %372 = vmatpush1.msra.mxu0 0.0
        %373 = vmatprep.subr.mxu0 0.0
        %374 = vmatpush1.msra.mxu0 0.0
        %375 = vmatprep.subr.mxu0 0.0
        %376 = vmatpush1.msra.mxu0 0.0
        %377 = vmatprep.subr.mxu0 0.0
        %378 = vmatpush1.msra.mxu0 0.0
        %379 = vmatprep.subr.mxu0 0.0
        %380 = vmatpush1.msra.mxu0 0.0
        %381 = vmatprep.subr.mxu0 0.0
        %382 = vmatpush1.msra.mxu0 0.0
        %383 = vmatprep.subr.mxu0 0.0
        %384 = vmatpush1.msra.mxu0 0.0
        %385 = vmatprep.subr.mxu0 0.0
        %386 = vmatpush1.msra.mxu0 0.0
        %387 = vmatprep.subr.mxu0 0.0
        %388 = vmatpush1.msra.mxu0 0.0
        %389 = vmatprep.subr.mxu0 0.0
        %390 = vmatpush1.msra.mxu0 0.0
        %391 = vmatprep.subr.mxu0 0.0
        %392 = vmatpush1.msra.mxu0 0.0
        %393 = vmatprep.subr.mxu0 0.0
        %394 = vmatpush1.msra.mxu0 0.0
        %395 = vmatprep.subr.mxu0 0.0
        %396 = vmatpush1.msra.mxu0 0.0
        %397 = vmatprep.subr.mxu0 0.0
        %398 = vmatpush1.msra.mxu0 0.0
        %399 = vmatprep.mubr.f32.mxu0 0.0
        %400 = vmatmul.mubr.f32.gmra.mrb[0].mxu0 %v329
        %v401 = vpop.f32.mrb[0].mxu0
        %v402 = vadd.f32 %v326, %v401
        %v403 = vpop.f32.mrb[0].mxu0
        %404 = vdwg.mxu0
        %v405 = vxor.u32 %v402, 2147483648
        %v406 = vmul.f32 %v405, 1.442695
        %v407 = vpow.pop %v406
        %v408 = vadd.f32 %v407, 1.0
        %v409 = vrcp.pop %v408
        %v410 = vmul.f32 1.0, %v409
        %412 = vset.pattern.permute.xlu0 0
        %413 = vperm.xlu0 %412, %v410
        %v414 = vpop.permute.xlu0 %413
        %v416 = vmul.f32 %v414, %v241
        %v417 = vmul.f32 %v414, %v242
        %418 = vst [vmem:[%s240] sm:$0xff] %v416
        %419 = vst [vmem:[%s240 + $0x8] sm:$0xff] %v417
        %s420 = sand.u32 %s140, 1
        %s421 = scalar_lea.sflag [#allocation4], %s420
        %s422 = sand.u32 %s140, 1
        %s423 = smul.addr %s422, 16
        %s424 = scalar_lea.vmem [#allocation5], %s423
        // Predicated region
        $region45: #{tpu_custom_call.1} parent=39 // pred_check
          %p425 = pneg %p150
        $region46: #{tpu_custom_call.1} parent=39 // pred_check_branch
          %427 = sbr.rel (%p425) target = $region48
        $region47: #{tpu_custom_call.1} parent=39 // pred_region
          %s429 = ssub.s32 256, 256
          %430 = vsyncadd %s421, %s429
          %s431 = smul.addr %s22, 2
          %s432 = smul.addr %s431, 128
          %s433 = scalar_lea.hbm %s5, %s432
          %s435 = sshll.u32 %s424, 4
          %s436 = int_to_ptr.vmem [resolvable:$true] %s435
          %438 = dma.vmem_to_hbm [thread:$0]  %s436, 256, %s433, %s421
        $region48: #{tpu_custom_call.1} parent=39 // pred_fallthru
          _
      $region40: #{tpu_custom_call.1} parent=5 // pred_fallthru
        _
      %p439 = scmp.le.s32.totalorder 2, %s17
      // Predicated region
      $region49: #{tpu_custom_call.1} parent=5 // pred_check
        %p440 = pneg %p439
      $region50: #{tpu_custom_call.1} parent=5 // pred_check_branch
        %442 = sbr.rel (%p440) target = $region52
      $region51: #{tpu_custom_call.1} parent=5 // pred_region
        %s443 = ssub.s32 %s17, 2
        // Predicated region
        $region53: #{tpu_custom_call.1} parent=51 // pred_check
          %p444 = pneg %p156
        $region54: #{tpu_custom_call.1} parent=51 // pred_check_branch
          %446 = sbr.rel (%p444) target = $region56
        $region55: #{tpu_custom_call.1} parent=51 // pred_region
          %s447 = sand.u32 %s141, 1
          %s448 = scalar_lea.sflag [#allocation4], %s447
          %s449 = sand.u32 %s141, 1
          %s450 = smul.addr %s449, 16
          %s451 = scalar_lea.vmem [#allocation5], %s450
          %452 = dma.done %s448, 256
        $region56: #{tpu_custom_call.1} parent=51 // pred_fallthru
          _
      $region52: #{tpu_custom_call.1} parent=5 // pred_fallthru
        _
    $region6: #{tpu_custom_call.1} parent=1 // loop_footer
      %s21 = sadd.s32 1, %s17
    $region7: #{tpu_custom_call.1} parent=1 // loop_footer_branch
      %16 = sbr.rel target = $region3
    $region8: #{tpu_custom_call.1} parent=1 // loop_exit
      _
    %453 = vsyncpa [#allocation3], 1
    %s454 = scalar_lea.sflag [#allocation3], 1
    %455 = vsyncpa %s454, 1
    %456 = vsyncpa [#allocation4], 1
    %s457 = scalar_lea.sflag [#allocation4], 1
    %458 = vsyncpa %s457, 1

</llo_original>
